<compile_context>
chip_gen: v7x
topology: tpu7x:2x2x1
jax: 0.10.0
libtpu: 0.0.40
codegen_flags: <defaults>
</compile_context>

<pallas_src>
import jax
import jax.numpy as jnp
from jax.experimental import pallas as pl
from jax.experimental.pallas import tpu as pltpu

# ----------------------------- sizes ----------------------------------------
B = 8            # test batch
D_IN = 32        # `inputsize` constructor arg
H1 = 256         # fc1_1 width
H2 = 64          # fc2_1 width
H3 = 1           # fc3_1 width
OUT_PAD = 128    # lane-dense padding of the scalar fc3 output
BN_EPS = 1e-5    # nn.BatchNorm1d default eps


def _round_up(n, m):
    return ((n + m - 1) // m) * m


# --------------------- Pallas kernel: fully fused MLP -----------------------
def attr1_kernel(alpha_ref,                      # SMEM (scalar-prefetch): (3,)
                 x_ref,                          # (TM, D_IN)
                 w1_ref, b1_ref,                 # (D_IN, 256) / (1, 256)
                 bn_scale_ref, bn_shift_ref,     # (1, 256) folded BN (eval)
                 w2_ref, b2_ref,                 # (256, 64) / (1, 64)
                 w3_ref, b3_ref,                 # (64, 128) / (1, 128)  zero-padded
                 out_ref,                        # (TM, 128) lane-dense padded out
                 feat_ref):                      # (TM, 256) pre-BN features
    # Read PReLU slopes from SMEM up-front so scalar loads / vreg broadcasts
    # overlap the first MXU push.
    a1 = alpha_ref[0]
    a2 = alpha_ref[1]
    a3 = alpha_ref[2]

    x = x_ref[...]

    # fc1_1
    y1 = jnp.dot(x, w1_ref[...], preferred_element_type=jnp.float32) + b1_ref[...]
    feat_ref[...] = y1                           # f_out_a (the .clone())

    # bn1_1 (eval-mode folded) + PReLU(a1); dropout is identity at inference
    # TODO(synk): nn.Dropout / BatchNorm1d batch-statistics are train-time
    # behaviours; this kernel implements the inference forward pass.
    y = y1 * bn_scale_ref[...] + bn_shift_ref[...]
    y = jnp.maximum(y, 0.0) + a1 * jnp.minimum(y, 0.0)

    # fc2_1 + PReLU(a2)
    y = jnp.dot(y, w2_ref[...], preferred_element_type=jnp.float32) + b2_ref[...]
    y = jnp.maximum(y, 0.0) + a2 * jnp.minimum(y, 0.0)

    # fc3_1 (padded to 128 lanes; pads are zero weight + zero bias) + PReLU(a3)
    y = jnp.dot(y, w3_ref[...], preferred_element_type=jnp.float32) + b3_ref[...]
    out_ref[...] = jnp.maximum(y, 0.0) + a3 * jnp.minimum(y, 0.0)


# --------------------- one-time parameter preparation ------------------------
def prepare_params(raw_params):
    """Fold BatchNorm1d (eval) and pad fc3 to 128 lanes.  Call once."""
    (w1, b1, gamma, beta, run_mean, run_var, w2, b2, w3, b3, alphas) = raw_params
    inv_std = 1.0 / jnp.sqrt(run_var + BN_EPS)
    bn_scale = (gamma * inv_std).reshape(1, H1)
    bn_shift = (beta - run_mean * gamma * inv_std).reshape(1, H1)
    w3p = jnp.zeros((H2, OUT_PAD), jnp.float32).at[:, :H3].set(w3)
    b3p = jnp.zeros((1, OUT_PAD), jnp.float32).at[:, :H3].set(b3.reshape(1, H3))
    return (w1, b1.reshape(1, H1), bn_scale, bn_shift,
            w2, b2.reshape(1, H2), w3p, b3p, alphas)


# ----------------------------- wrapper ---------------------------------------
def attr1_forward(x, prepared_params, tm=256):
    """Row-gridded fused forward.  Weights stay VMEM-resident across steps."""
    (w1, b1, bn_scale, bn_shift, w2, b2, w3p, b3p, alphas) = prepared_params

    b = x.shape[0]
    tm = int(min(tm, _round_up(b, 8)))           # sublane-aligned row tile
    b_pad = _round_up(b, tm)
    if b_pad != b:
        x = jnp.pad(x, ((0, b_pad - b), (0, 0)))
    grid = (b_pad // tm,)

    row = lambda i, alphas_ref: (i, 0)           # streamed over the batch axis
    const = lambda i, alphas_ref: (0, 0)         # VMEM-resident constants

    out_pad, feat = pl.pallas_call(
        attr1_kernel,
        out_shape=(jax.ShapeDtypeStruct((b_pad, OUT_PAD), jnp.float32),
                   jax.ShapeDtypeStruct((b_pad, H1), jnp.float32)),
        grid_spec=pltpu.PrefetchScalarGridSpec(
            num_scalar_prefetch=1,               # alphas -> SMEM
            grid=grid,
            in_specs=[
                pl.BlockSpec((tm, D_IN), row),        # x
                pl.BlockSpec((D_IN, H1), const),      # w1
                pl.BlockSpec((1, H1), const),         # b1
                pl.BlockSpec((1, H1), const),         # bn_scale
                pl.BlockSpec((1, H1), const),         # bn_shift
                pl.BlockSpec((H1, H2), const),        # w2
                pl.BlockSpec((1, H2), const),         # b2
                pl.BlockSpec((H2, OUT_PAD), const),   # w3 (padded)
                pl.BlockSpec((1, OUT_PAD), const),    # b3 (padded)
            ],
            out_specs=(pl.BlockSpec((tm, OUT_PAD), row),   # lane-dense out
                       pl.BlockSpec((tm, H1), row)),       # features
        ),
        compiler_params=pltpu.CompilerParams(
            dimension_semantics=("parallel",)),  # megacore split on v7x
    )(alphas, x, w1, b1, bn_scale, bn_shift, w2, b2, w3p, b3p)

    return out_pad[:b, :H3], feat[:b]


# ----------------------------- params ----------------------------------------
def init_params(key):
    ks = jax.random.split(key, 8)

    def lin(k, shape, scale=0.05):
        return jax.random.normal(k, shape, jnp.float32) * scale

    w1 = lin(ks[0], (D_IN, H1))                   # Linear stored as (in, out)
    b1 = lin(ks[1], (1, H1))
    gamma = jnp.ones((H1,), jnp.float32)          # BatchNorm1d weight
    beta = jnp.zeros((H1,), jnp.float32)          # BatchNorm1d bias
    run_mean = lin(ks[2], (H1,))                  # running_mean
    run_var = jnp.abs(lin(ks[3], (H1,))) + 1.0    # running_var > 0
    w2 = lin(ks[4], (H1, H2))
    b2 = lin(ks[5], (1, H2))
    w3 = lin(ks[6], (H2, H3))
    b3 = lin(ks[7], (1, H3))
    alphas = jnp.full((3,), 0.25, jnp.float32)    # nn.PReLU() default init
    return (w1, b1, gamma, beta, run_mean, run_var, w2, b2, w3, b3, alphas)


# ------------------------- pure-JAX reference ---------------------------------
def ref_forward(x, raw_params):
    (w1, b1, gamma, beta, run_mean, run_var, w2, b2, w3, b3, alphas) = raw_params
    y1 = x @ w1 + b1
    f = y1
    y = (y1 - run_mean) / jnp.sqrt(run_var + BN_EPS) * gamma + beta
    y = jnp.where(y > 0, y, alphas[0] * y)
    y = y @ w2 + b2
    y = jnp.where(y > 0, y, alphas[1] * y)
    y = y @ w3 + b3
    y = jnp.where(y > 0, y, alphas[2] * y)
    return y, f


if __name__ == "__main__":
    key = jax.random.PRNGKey(0)
    k_x, k_p = jax.random.split(key)
    x = jax.random.normal(k_x, (B, D_IN), jnp.float32)
    raw_params = init_params(k_p)
    prep = prepare_params(raw_params)

    out_a, f_out_a = attr1_forward(x, prep)
    jax.block_until_ready((out_a, f_out_a))

    assert out_a.shape == (B, H3), out_a.shape
    assert f_out_a.shape == (B, H1), f_out_a.shape

    out_ref, f_ref = ref_forward(x, raw_params)
    assert jnp.allclose(out_a, out_ref, rtol=1e-4, atol=1e-4)
    assert jnp.allclose(f_out_a, f_ref, rtol=1e-4, atol=1e-4)
    assert bool(jnp.all(jnp.isfinite(out_a)))
    assert bool(jnp.all(jnp.isfinite(f_out_a)))
    print("KERNEL_OK")
</pallas_src>

<mosaic_0001>
module attributes {stable_mosaic.version = 11 : i64} {
  func.func @attr1_kernel(%arg0: i32, %arg1: memref<3xf32, #tpu.memory_space<smem>>, %arg2: memref<8x32xf32, #tpu.memory_space<vmem>>, %arg3: memref<32x256xf32, #tpu.memory_space<vmem>>, %arg4: memref<1x256xf32, #tpu.memory_space<vmem>>, %arg5: memref<1x256xf32, #tpu.memory_space<vmem>>, %arg6: memref<1x256xf32, #tpu.memory_space<vmem>>, %arg7: memref<256x64xf32, #tpu.memory_space<vmem>>, %arg8: memref<1x64xf32, #tpu.memory_space<vmem>>, %arg9: memref<64x128xf32, #tpu.memory_space<vmem>>, %arg10: memref<1x128xf32, #tpu.memory_space<vmem>>, %arg11: memref<8x128xf32, #tpu.memory_space<vmem>>, %arg12: memref<8x256xf32, #tpu.memory_space<vmem>>) attributes {dimension_semantics = [#tpu.dimension_semantics<parallel>], iteration_bounds = array<i64: 1>, scalar_prefetch = 1 : i64, scratch_operands = 0 : i64, tpu.core_type = #tpu.core_type<tc>, window_params = [{transform_indices = @transform_0, window_bounds = array<i64: 8, 32>}, {pipeline_mode = #tpu.pipeline_mode<synchronous>, transform_indices = @transform_1, window_bounds = array<i64: 32, 256>}, {pipeline_mode = #tpu.pipeline_mode<synchronous>, transform_indices = @transform_2, window_bounds = array<i64: 1, 256>}, {pipeline_mode = #tpu.pipeline_mode<synchronous>, transform_indices = @transform_3, window_bounds = array<i64: 1, 256>}, {pipeline_mode = #tpu.pipeline_mode<synchronous>, transform_indices = @transform_4, window_bounds = array<i64: 1, 256>}, {pipeline_mode = #tpu.pipeline_mode<synchronous>, transform_indices = @transform_5, window_bounds = array<i64: 256, 64>}, {pipeline_mode = #tpu.pipeline_mode<synchronous>, transform_indices = @transform_6, window_bounds = array<i64: 1, 64>}, {pipeline_mode = #tpu.pipeline_mode<synchronous>, transform_indices = @transform_7, window_bounds = array<i64: 64, 128>}, {pipeline_mode = #tpu.pipeline_mode<synchronous>, transform_indices = @transform_8, window_bounds = array<i64: 1, 128>}, {transform_indices = @transform_9, window_bounds = array<i64: 8, 128>}, {transform_indices = @transform_10, window_bounds = array<i64: 8, 256>}]} {
    %c0 = arith.constant 0 : index
    %0 = memref.load %arg1[%c0] : memref<3xf32, #tpu.memory_space<smem>>
    %c1 = arith.constant 1 : index
    %1 = memref.load %arg1[%c1] : memref<3xf32, #tpu.memory_space<smem>>
    %c2 = arith.constant 2 : index
    %2 = memref.load %arg1[%c2] : memref<3xf32, #tpu.memory_space<smem>>
    %c0_0 = arith.constant 0 : index
    %c0_1 = arith.constant 0 : index
    %3 = vector.load %arg2[%c0_0, %c0_1] : memref<8x32xf32, #tpu.memory_space<vmem>>, vector<8x32xf32>
    %c0_2 = arith.constant 0 : index
    %c0_3 = arith.constant 0 : index
    %4 = vector.load %arg3[%c0_2, %c0_3] : memref<32x256xf32, #tpu.memory_space<vmem>>, vector<32x256xf32>
    %cst = arith.constant dense<0.000000e+00> : vector<8x256xf32>
    %5 = tpu.matmul %3, %4, %cst {dimension_numbers = #tpu.dot_dimension_numbers<[1], [0], [0], [1], [0, 0, 1, 1], [], []>} : vector<8x32xf32>, vector<32x256xf32>, vector<8x256xf32> -> vector<8x256xf32>
    %c0_4 = arith.constant 0 : index
    %c0_5 = arith.constant 0 : index
    %6 = vector.load %arg4[%c0_4, %c0_5] : memref<1x256xf32, #tpu.memory_space<vmem>>, vector<1x256xf32>
    %7 = vector.broadcast %6 : vector<1x256xf32> to vector<8x256xf32>
    %8 = arith.addf %5, %7 : vector<8x256xf32>
    %c0_6 = arith.constant 0 : index
    %c0_7 = arith.constant 0 : index
    %9 = vector.load %arg12[%c0_6, %c0_7] : memref<8x256xf32, #tpu.memory_space<vmem>>, vector<8x256xf32>
    tpu.vector_store %arg12[%c0_6, %c0_7], %8 {strides = array<i32>} : memref<8x256xf32, #tpu.memory_space<vmem>>, vector<8x256xf32>,
    %c0_8 = arith.constant 0 : index
    %c0_9 = arith.constant 0 : index
    %10 = vector.load %arg5[%c0_8, %c0_9] : memref<1x256xf32, #tpu.memory_space<vmem>>, vector<1x256xf32>
    %11 = vector.broadcast %10 : vector<1x256xf32> to vector<8x256xf32>
    %12 = arith.mulf %8, %11 : vector<8x256xf32>
    %c0_10 = arith.constant 0 : index
    %c0_11 = arith.constant 0 : index
    %13 = vector.load %arg6[%c0_10, %c0_11] : memref<1x256xf32, #tpu.memory_space<vmem>>, vector<1x256xf32>
    %14 = vector.broadcast %13 : vector<1x256xf32> to vector<8x256xf32>
    %15 = arith.addf %12, %14 : vector<8x256xf32>
    %cst_12 = arith.constant 0.000000e+00 : f32
    %16 = vector.broadcast %cst_12 : f32 to vector<8x256xf32>
    %17 = arith.maximumf %15, %16 : vector<8x256xf32>
    %cst_13 = arith.constant 0.000000e+00 : f32
    %18 = vector.broadcast %cst_13 : f32 to vector<8x256xf32>
    %19 = arith.minimumf %15, %18 : vector<8x256xf32>
    %20 = vector.broadcast %0 : f32 to vector<8x256xf32>
    %21 = arith.mulf %20, %19 : vector<8x256xf32>
    %22 = arith.addf %17, %21 : vector<8x256xf32>
    %c0_14 = arith.constant 0 : index
    %c0_15 = arith.constant 0 : index
    %23 = vector.load %arg7[%c0_14, %c0_15] : memref<256x64xf32, #tpu.memory_space<vmem>>, vector<256x64xf32>
    %cst_16 = arith.constant dense<0.000000e+00> : vector<8x64xf32>
    %24 = tpu.matmul %22, %23, %cst_16 {dimension_numbers = #tpu.dot_dimension_numbers<[1], [0], [0], [1], [0, 0, 1, 1], [], []>} : vector<8x256xf32>, vector<256x64xf32>, vector<8x64xf32> -> vector<8x64xf32>
    %c0_17 = arith.constant 0 : index
    %c0_18 = arith.constant 0 : index
    %25 = vector.load %arg8[%c0_17, %c0_18] : memref<1x64xf32, #tpu.memory_space<vmem>>, vector<1x64xf32>
    %26 = vector.broadcast %25 : vector<1x64xf32> to vector<8x64xf32>
    %27 = arith.addf %24, %26 : vector<8x64xf32>
    %cst_19 = arith.constant 0.000000e+00 : f32
    %28 = vector.broadcast %cst_19 : f32 to vector<8x64xf32>
    %29 = arith.maximumf %27, %28 : vector<8x64xf32>
    %cst_20 = arith.constant 0.000000e+00 : f32
    %30 = vector.broadcast %cst_20 : f32 to vector<8x64xf32>
    %31 = arith.minimumf %27, %30 : vector<8x64xf32>
    %32 = vector.broadcast %1 : f32 to vector<8x64xf32>
    %33 = arith.mulf %32, %31 : vector<8x64xf32>
    %34 = arith.addf %29, %33 : vector<8x64xf32>
    %c0_21 = arith.constant 0 : index
    %c0_22 = arith.constant 0 : index
    %35 = vector.load %arg9[%c0_21, %c0_22] : memref<64x128xf32, #tpu.memory_space<vmem>>, vector<64x128xf32>
    %cst_23 = arith.constant dense<0.000000e+00> : vector<8x128xf32>
    %36 = tpu.matmul %34, %35, %cst_23 {dimension_numbers = #tpu.dot_dimension_numbers<[1], [0], [0], [1], [0, 0, 1, 1], [], []>} : vector<8x64xf32>, vector<64x128xf32>, vector<8x128xf32> -> vector<8x128xf32>
    %c0_24 = arith.constant 0 : index
    %c0_25 = arith.constant 0 : index
    %37 = vector.load %arg10[%c0_24, %c0_25] : memref<1x128xf32, #tpu.memory_space<vmem>>, vector<1x128xf32>
    %38 = vector.broadcast %37 : vector<1x128xf32> to vector<8x128xf32>
    %39 = arith.addf %36, %38 : vector<8x128xf32>
    %cst_26 = arith.constant 0.000000e+00 : f32
    %40 = vector.broadcast %cst_26 : f32 to vector<8x128xf32>
    %41 = arith.maximumf %39, %40 : vector<8x128xf32>
    %cst_27 = arith.constant 0.000000e+00 : f32
    %42 = vector.broadcast %cst_27 : f32 to vector<8x128xf32>
    %43 = arith.minimumf %39, %42 : vector<8x128xf32>
    %44 = vector.broadcast %2 : f32 to vector<8x128xf32>
    %45 = arith.mulf %44, %43 : vector<8x128xf32>
    %46 = arith.addf %41, %45 : vector<8x128xf32>
    %c0_28 = arith.constant 0 : index
    %c0_29 = arith.constant 0 : index
    %47 = vector.load %arg11[%c0_28, %c0_29] : memref<8x128xf32, #tpu.memory_space<vmem>>, vector<8x128xf32>
    tpu.vector_store %arg11[%c0_28, %c0_29], %46 {strides = array<i32>} : memref<8x128xf32, #tpu.memory_space<vmem>>, vector<8x128xf32>,
    return
  }
  func.func @transform_0(%arg0: i32, %arg1: memref<3xf32, #tpu.memory_space<smem>>) -> (i32, i32) {
    %c0_i32 = arith.constant 0 : i32
    %c0_i32_0 = arith.constant 0 : i32
    return %arg0, %c0_i32 : i32, i32
  }
  func.func @transform_1(%arg0: i32, %arg1: memref<3xf32, #tpu.memory_space<smem>>) -> (i32, i32) {
    %c0_i32 = arith.constant 0 : i32
    %c0_i32_0 = arith.constant 0 : i32
    %c0_i32_1 = arith.constant 0 : i32
    return %c0_i32, %c0_i32_0 : i32, i32
  }
  func.func @transform_2(%arg0: i32, %arg1: memref<3xf32, #tpu.memory_space<smem>>) -> (i32, i32) {
    %c0_i32 = arith.constant 0 : i32
    %c0_i32_0 = arith.constant 0 : i32
    %c0_i32_1 = arith.constant 0 : i32
    return %c0_i32, %c0_i32_0 : i32, i32
  }
  func.func @transform_3(%arg0: i32, %arg1: memref<3xf32, #tpu.memory_space<smem>>) -> (i32, i32) {
    %c0_i32 = arith.constant 0 : i32
    %c0_i32_0 = arith.constant 0 : i32
    %c0_i32_1 = arith.constant 0 : i32
    return %c0_i32, %c0_i32_0 : i32, i32
  }
  func.func @transform_4(%arg0: i32, %arg1: memref<3xf32, #tpu.memory_space<smem>>) -> (i32, i32) {
    %c0_i32 = arith.constant 0 : i32
    %c0_i32_0 = arith.constant 0 : i32
    %c0_i32_1 = arith.constant 0 : i32
    return %c0_i32, %c0_i32_0 : i32, i32
  }
  func.func @transform_5(%arg0: i32, %arg1: memref<3xf32, #tpu.memory_space<smem>>) -> (i32, i32) {
    %c0_i32 = arith.constant 0 : i32
    %c0_i32_0 = arith.constant 0 : i32
    %c0_i32_1 = arith.constant 0 : i32
    return %c0_i32, %c0_i32_0 : i32, i32
  }
  func.func @transform_6(%arg0: i32, %arg1: memref<3xf32, #tpu.memory_space<smem>>) -> (i32, i32) {
    %c0_i32 = arith.constant 0 : i32
    %c0_i32_0 = arith.constant 0 : i32
    %c0_i32_1 = arith.constant 0 : i32
    return %c0_i32, %c0_i32_0 : i32, i32
  }
  func.func @transform_7(%arg0: i32, %arg1: memref<3xf32, #tpu.memory_space<smem>>) -> (i32, i32) {
    %c0_i32 = arith.constant 0 : i32
    %c0_i32_0 = arith.constant 0 : i32
    %c0_i32_1 = arith.constant 0 : i32
    return %c0_i32, %c0_i32_0 : i32, i32
  }
  func.func @transform_8(%arg0: i32, %arg1: memref<3xf32, #tpu.memory_space<smem>>) -> (i32, i32) {
    %c0_i32 = arith.constant 0 : i32
    %c0_i32_0 = arith.constant 0 : i32
    %c0_i32_1 = arith.constant 0 : i32
    return %c0_i32, %c0_i32_0 : i32, i32
  }
  func.func @transform_9(%arg0: i32, %arg1: memref<3xf32, #tpu.memory_space<smem>>) -> (i32, i32) {
    %c0_i32 = arith.constant 0 : i32
    %c0_i32_0 = arith.constant 0 : i32
    return %arg0, %c0_i32 : i32, i32
  }
  func.func @transform_10(%arg0: i32, %arg1: memref<3xf32, #tpu.memory_space<smem>>) -> (i32, i32) {
    %c0_i32 = arith.constant 0 : i32
    %c0_i32_0 = arith.constant 0 : i32
    return %arg0, %c0_i32 : i32, i32
  }
}

</mosaic_0001>

<llo_original>
// kernel: tpu_custom_call.1
$region0: #{tpu_custom_call.1}
  #allocation0 [shape = 'u32[]', space=smem, size = 0x4, offset = 0x4, fixed_abs, tag = 'smem constant byte address 0x4 - core index']
  #allocation1 [shape = 'u32[144,128]{1,0:T(1,128)}', space=vmem, size = 0x12000, scoped, tag = 'internal scratch']
  #allocation2 [shape = 's32[1]{0}', space=sflag, size = 0x4, scoped, tag = 'scoped memory for tpu_custom_call.1']
  #allocation3 [shape = 'u8[512]{0}', space=smem, size = 0x200, scoped, tag = 'prefetched SMEM operand 0']
  %s0 = inlined_call_operand.vmem [shape: f32[3], index: 0, kind: input, shape index: {}]
  %s1 = inlined_call_operand.vmem [shape: f32[8,32], index: 1, kind: input, shape index: {}]
  %s2 = inlined_call_operand.vmem [shape: f32[32,256], index: 2, kind: input, shape index: {}]
  %s3 = inlined_call_operand.vmem [shape: f32[1,256], index: 3, kind: input, shape index: {}]
  %s4 = inlined_call_operand.vmem [shape: f32[1,256], index: 4, kind: input, shape index: {}]
  %s5 = inlined_call_operand.vmem [shape: f32[1,256], index: 5, kind: input, shape index: {}]
  %s6 = inlined_call_operand.vmem [shape: f32[256,64], index: 6, kind: input, shape index: {}]
  %s7 = inlined_call_operand.vmem [shape: f32[1,64], index: 7, kind: input, shape index: {}]
  %s8 = inlined_call_operand.vmem [shape: f32[64,128], index: 8, kind: input, shape index: {}]
  %s9 = inlined_call_operand.vmem [shape: f32[1,128], index: 9, kind: input, shape index: {}]
  %s10 = inlined_call_operand.hbm [shape: f32[8,128], index: 10, kind: output, shape index: {0}]
  %s11 = inlined_call_operand.hbm [shape: f32[8,256], index: 11, kind: output, shape index: {1}]
  %12 = xla_tuple %s10, %s11
  %s13 = sld [smem:[#allocation0]]
  $region54: #{tpu_custom_call.1} parent=0
    _
  %s15 = ssub.s32 1, %s13
  %s16 = scalar_select 0, %s15, %s13
  %s17 = sshll.u32 %s0, 4
  %s18 = int_to_ptr.vmem [resolvable:$true] %s17
  %20 = dma.vmem_to_smem %s18, 16, [#allocation3], [#allocation2]
  %21 = dma.done [#allocation2], 16
  %22 = sfence
  $region1: #{tpu_custom_call.1} parent=0
    #allocation4 [shape = 'u8[4096]{0}', space=vmem, size = 0x1000, scoped, tag = 'output window, operand 0, single buffered']
    #allocation5 [shape = 's32[1]{0}', space=sflag, size = 0x4, scoped, tag = 'scoped memory for tpu_custom_call.1']
    #allocation6 [shape = 'u8[8192]{0}', space=vmem, size = 0x2000, scoped, tag = 'output window, operand 1, single buffered']
    #allocation7 [shape = 's32[1]{0}', space=sflag, size = 0x4, scoped, tag = 'scoped memory for tpu_custom_call.1']
    %23 = vsyncpa [#allocation5], 0
    %24 = vsyncpa [#allocation7], 0
    // Predicated region
    $region2: #{tpu_custom_call.1} parent=1 // pred_check
      _
    $region3: #{tpu_custom_call.1} parent=1 // pred_check_branch
      %26 = sbr.rel (0) target = $region5
    $region4: #{tpu_custom_call.1} parent=1 // pred_region
      _
    $region5: #{tpu_custom_call.1} parent=1 // pred_fallthru
      _
    // Predicated region
    $region6: #{tpu_custom_call.1} parent=1 // pred_check
      _
    $region7: #{tpu_custom_call.1} parent=1 // pred_check_branch
      %28 = sbr.rel (0) target = $region9
    $region8: #{tpu_custom_call.1} parent=1 // pred_region
      _
    $region9: #{tpu_custom_call.1} parent=1 // pred_fallthru
      _
    // Predicated region
    $region10: #{tpu_custom_call.1} parent=1 // pred_check
      _
    $region11: #{tpu_custom_call.1} parent=1 // pred_check_branch
      %30 = sbr.rel (0) target = $region13
    $region12: #{tpu_custom_call.1} parent=1 // pred_region
      _
    $region13: #{tpu_custom_call.1} parent=1 // pred_fallthru
      _
    // Predicated region
    $region14: #{tpu_custom_call.1} parent=1 // pred_check
      _
    $region15: #{tpu_custom_call.1} parent=1 // pred_check_branch
      %32 = sbr.rel (0) target = $region17
    $region16: #{tpu_custom_call.1} parent=1 // pred_region
      _
    $region17: #{tpu_custom_call.1} parent=1 // pred_fallthru
      _
    // Predicated region
    $region18: #{tpu_custom_call.1} parent=1 // pred_check
      _
    $region19: #{tpu_custom_call.1} parent=1 // pred_check_branch
      %34 = sbr.rel (0) target = $region21
    $region20: #{tpu_custom_call.1} parent=1 // pred_region
      _
    $region21: #{tpu_custom_call.1} parent=1 // pred_fallthru
      _
    // Predicated region
    $region22: #{tpu_custom_call.1} parent=1 // pred_check
      _
    $region23: #{tpu_custom_call.1} parent=1 // pred_check_branch
      %36 = sbr.rel (0) target = $region25
    $region24: #{tpu_custom_call.1} parent=1 // pred_region
      _
    $region25: #{tpu_custom_call.1} parent=1 // pred_fallthru
      _
    // Predicated region
    $region26: #{tpu_custom_call.1} parent=1 // pred_check
      _
    $region27: #{tpu_custom_call.1} parent=1 // pred_check_branch
      %38 = sbr.rel (0) target = $region29
    $region28: #{tpu_custom_call.1} parent=1 // pred_region
      _
    $region29: #{tpu_custom_call.1} parent=1 // pred_fallthru
      _
    // Predicated region
    $region30: #{tpu_custom_call.1} parent=1 // pred_check
      _
    $region31: #{tpu_custom_call.1} parent=1 // pred_check_branch
      %40 = sbr.rel (0) target = $region33
    $region32: #{tpu_custom_call.1} parent=1 // pred_region
      _
    $region33: #{tpu_custom_call.1} parent=1 // pred_fallthru
      _
    // Predicated region
    $region34: #{tpu_custom_call.1} parent=1 // pred_check
      _
    $region35: #{tpu_custom_call.1} parent=1 // pred_check_branch
      %42 = sbr.rel (0) target = $region37
    $region36: #{tpu_custom_call.1} parent=1 // pred_region
      _
    $region37: #{tpu_custom_call.1} parent=1 // pred_fallthru
      _
    %s43 = sld [smem:[#allocation3]]
    %s44 = sld [smem:[#allocation3 + $0x1]]
    %s45 = sld [smem:[#allocation3 + $0x2]]
    %v46 = vld [vmem:[%s1] sm:$0xff]
    %v47 = vld [vmem:[%s2] sm:$0xff]
    %v48 = vld [vmem:[%s2 + $0x8] sm:$0xff]
    %v49 = vld [vmem:[%s2 + $0x10] sm:$0xff]
    %v50 = vld [vmem:[%s2 + $0x18] sm:$0xff]
    %v51 = vld [vmem:[%s2 + $0x20] sm:$0xff]
    %v52 = vld [vmem:[%s2 + $0x28] sm:$0xff]
    %v53 = vld [vmem:[%s2 + $0x30] sm:$0xff]
    %v54 = vld [vmem:[%s2 + $0x38] sm:$0xff]
    %v55 = vld [vmem:[%s3] sm:$0x3]
    %v57 = vlaneseq
    %v58 = vshrl.u32 %v57, 7
    %v59 = vsub.s32 0, %v58
    %v60 = vrot.slane %v55, %v59
    %v61 = vlaneseq
    %v62 = vshrl.u32 %v61, 7
    %v63 = vsub.s32 1, %v62
    %v64 = vrot.slane %v55, %v63
    %vm67 = vcmask 261120
    %v69 = vsel %vm67, %v46, 0
    %71 = vmatprep.subr.mxu0 %v48
    %72 = vmatpush1.msra.mxu0 %v47
    %73 = vmatprep.subr.mxu0 %v50
    %74 = vmatpush1.msra.mxu0 %v49
    %75 = vmatprep.subr.mxu0 %v52
    %76 = vmatpush1.msra.mxu0 %v51
    %77 = vmatprep.subr.mxu0 %v54
    %78 = vmatpush1.msra.mxu0 %v53
    %79 = vmatprep.subr.mxu0 0.0
    %80 = vmatpush1.msra.mxu0 0.0
    %81 = vmatprep.subr.mxu0 0.0
    %82 = vmatpush1.msra.mxu0 0.0
    %83 = vmatprep.subr.mxu0 0.0
    %84 = vmatpush1.msra.mxu0 0.0
    %85 = vmatprep.subr.mxu0 0.0
    %86 = vmatpush1.msra.mxu0 0.0
    %87 = vmatprep.subr.mxu0 0.0
    %88 = vmatpush1.msra.mxu0 0.0
    %89 = vmatprep.subr.mxu0 0.0
    %90 = vmatpush1.msra.mxu0 0.0
    %91 = vmatprep.subr.mxu0 0.0
    %92 = vmatpush1.msra.mxu0 0.0
    %93 = vmatprep.subr.mxu0 0.0
    %94 = vmatpush1.msra.mxu0 0.0
    %95 = vmatprep.subr.mxu0 0.0
    %96 = vmatpush1.msra.mxu0 0.0
    %97 = vmatprep.subr.mxu0 0.0
    %98 = vmatpush1.msra.mxu0 0.0
    %99 = vmatprep.subr.mxu0 0.0
    %100 = vmatpush1.msra.mxu0 0.0
    %101 = vmatprep.subr.mxu0 0.0
    %102 = vmatpush1.msra.mxu0 0.0
    %103 = vmatprep.subr.mxu0 0.0
    %104 = vmatpush1.msra.mxu0 0.0
    %105 = vmatprep.subr.mxu0 0.0
    %106 = vmatpush1.msra.mxu0 0.0
    %107 = vmatprep.subr.mxu0 0.0
    %108 = vmatpush1.msra.mxu0 0.0
    %109 = vmatprep.subr.mxu0 0.0
    %110 = vmatpush1.msra.mxu0 0.0
    %111 = vmatprep.subr.mxu0 0.0
    %112 = vmatpush1.msra.mxu0 0.0
    %113 = vmatprep.subr.mxu0 0.0
    %114 = vmatpush1.msra.mxu0 0.0
    %115 = vmatprep.subr.mxu0 0.0
    %116 = vmatpush1.msra.mxu0 0.0
    %117 = vmatprep.subr.mxu0 0.0
    %118 = vmatpush1.msra.mxu0 0.0
    %119 = vmatprep.subr.mxu0 0.0
    %120 = vmatpush1.msra.mxu0 0.0
    %121 = vmatprep.subr.mxu0 0.0
    %122 = vmatpush1.msra.mxu0 0.0
    %123 = vmatprep.subr.mxu0 0.0
    %124 = vmatpush1.msra.mxu0 0.0
    %125 = vmatprep.subr.mxu0 0.0
    %126 = vmatpush1.msra.mxu0 0.0
    %127 = vmatprep.subr.mxu0 0.0
    %128 = vmatpush1.msra.mxu0 0.0
    %129 = vmatprep.subr.mxu0 0.0
    %130 = vmatpush1.msra.mxu0 0.0
    %131 = vmatprep.subr.mxu0 0.0
    %132 = vmatpush1.msra.mxu0 0.0
    %133 = vmatprep.subr.mxu0 0.0
    %134 = vmatpush1.msra.mxu0 0.0
    %135 = vmatprep.mubr.f32.mxu0 0.0
    %136 = vmatmul.mubr.f32.gmra.mrb[0].mxu0 %v69
    %v137 = vpop.f32.mrb[0].mxu0
    %v138 = vadd.f32 %v60, %v137
    %v139 = vpop.f32.mrb[0].mxu0
    %v140 = vadd.f32 %v64, %v139
    %141 = vdwg.mxu0
    %142 = vst [vmem:[#allocation6] sm:$0xff] %v138
    %143 = vst [vmem:[#allocation6 + $0x8] sm:$0xff] %v140
    %v144 = vld [vmem:[%s4] sm:$0x3]
    %v146 = vlaneseq
    %v147 = vshrl.u32 %v146, 7
    %v148 = vsub.s32 0, %v147
    %v149 = vrot.slane %v144, %v148
    %v150 = vlaneseq
    %v151 = vshrl.u32 %v150, 7
    %v152 = vsub.s32 1, %v151
    %v153 = vrot.slane %v144, %v152
    %v156 = vmul.f32 %v138, %v149
    %v157 = vmul.f32 %v140, %v153
    %v158 = vld [vmem:[%s5] sm:$0x3]
    %v160 = vlaneseq
    %v161 = vshrl.u32 %v160, 7
    %v162 = vsub.s32 0, %v161
    %v163 = vrot.slane %v158, %v162
    %v164 = vlaneseq
    %v165 = vshrl.u32 %v164, 7
    %v166 = vsub.s32 1, %v165
    %v167 = vrot.slane %v158, %v166
    %v170 = vadd.f32 %v156, %v163
    %v171 = vadd.f32 %v157, %v167
    %v172 = vmax.f32 %v170, 0.0
    %v173 = vmax.f32 %v171, 0.0
    %v174 = vmin.f32 %v170, 0.0
    %v175 = vmin.f32 %v171, 0.0
    %v176 = vstv %s43
    %v177 = vmul.f32 %v176, %v174
    %v178 = vmul.f32 %v176, %v175
    %v179 = vadd.f32 %v172, %v177
    %v180 = vadd.f32 %v173, %v178
    %v181 = vld [vmem:[%s6] sm:$0xff]
    %v182 = vld [vmem:[%s6 + $0x8] sm:$0xff]
    %v183 = vld [vmem:[%s6 + $0x10] sm:$0xff]
    %v184 = vld [vmem:[%s6 + $0x18] sm:$0xff]
    %v185 = vld [vmem:[%s6 + $0x20] sm:$0xff]
    %v186 = vld [vmem:[%s6 + $0x28] sm:$0xff]
    %v187 = vld [vmem:[%s6 + $0x30] sm:$0xff]
    %v188 = vld [vmem:[%s6 + $0x38] sm:$0xff]
    %v189 = vld [vmem:[%s6 + $0x40] sm:$0xff]
    %v190 = vld [vmem:[%s6 + $0x48] sm:$0xff]
    %v191 = vld [vmem:[%s6 + $0x50] sm:$0xff]
    %v192 = vld [vmem:[%s6 + $0x58] sm:$0xff]
    %v193 = vld [vmem:[%s6 + $0x60] sm:$0xff]
    %v194 = vld [vmem:[%s6 + $0x68] sm:$0xff]
    %v195 = vld [vmem:[%s6 + $0x70] sm:$0xff]
    %v196 = vld [vmem:[%s6 + $0x78] sm:$0xff]
    %v197 = vld [vmem:[%s6 + $0x80] sm:$0xff]
    %v198 = vld [vmem:[%s6 + $0x88] sm:$0xff]
    %v199 = vld [vmem:[%s6 + $0x90] sm:$0xff]
    %v200 = vld [vmem:[%s6 + $0x98] sm:$0xff]
    %v201 = vld [vmem:[%s6 + $0xa0] sm:$0xff]
    %v202 = vld [vmem:[%s6 + $0xa8] sm:$0xff]
    %v203 = vld [vmem:[%s6 + $0xb0] sm:$0xff]
    %v204 = vld [vmem:[%s6 + $0xb8] sm:$0xff]
    %v205 = vld [vmem:[%s6 + $0xc0] sm:$0xff]
    %v206 = vld [vmem:[%s6 + $0xc8] sm:$0xff]
    %v207 = vld [vmem:[%s6 + $0xd0] sm:$0xff]
    %v208 = vld [vmem:[%s6 + $0xd8] sm:$0xff]
    %v209 = vld [vmem:[%s6 + $0xe0] sm:$0xff]
    %v210 = vld [vmem:[%s6 + $0xe8] sm:$0xff]
    %v211 = vld [vmem:[%s6 + $0xf0] sm:$0xff]
    %v212 = vld [vmem:[%s6 + $0xf8] sm:$0xff]
    %v213 = vld [vmem:[%s7] sm:$0x1]
    %v215 = vlaneseq
    %v216 = vshrl.u32 %v215, 7
    %v217 = vsub.s32 0, %v216
    %v218 = vrot.slane %v213, %v217
    %220 = vmatprep.subr.mxu0 0.0
    %221 = vmatpush1.msra.mxu0 %v181
    %222 = vmatprep.subr.mxu0 0.0
    %223 = vmatpush1.msra.mxu0 %v182
    %224 = vmatprep.subr.mxu0 0.0
    %225 = vmatpush1.msra.mxu0 %v183
    %226 = vmatprep.subr.mxu0 0.0
    %227 = vmatpush1.msra.mxu0 %v184
    %228 = vmatprep.subr.mxu0 0.0
    %229 = vmatpush1.msra.mxu0 %v185
    %230 = vmatprep.subr.mxu0 0.0
    %231 = vmatpush1.msra.mxu0 %v186
    %232 = vmatprep.subr.mxu0 0.0
    %233 = vmatpush1.msra.mxu0 %v187
    %234 = vmatprep.subr.mxu0 0.0
    %235 = vmatpush1.msra.mxu0 %v188
    %236 = vmatprep.subr.mxu0 0.0
    %237 = vmatpush1.msra.mxu0 %v189
    %238 = vmatprep.subr.mxu0 0.0
    %239 = vmatpush1.msra.mxu0 %v190
    %240 = vmatprep.subr.mxu0 0.0
    %241 = vmatpush1.msra.mxu0 %v191
    %242 = vmatprep.subr.mxu0 0.0
    %243 = vmatpush1.msra.mxu0 %v192
    %244 = vmatprep.subr.mxu0 0.0
    %245 = vmatpush1.msra.mxu0 %v193
    %246 = vmatprep.subr.mxu0 0.0
    %247 = vmatpush1.msra.mxu0 %v194
    %248 = vmatprep.subr.mxu0 0.0
    %249 = vmatpush1.msra.mxu0 %v195
    %250 = vmatprep.subr.mxu0 0.0
    %251 = vmatpush1.msra.mxu0 %v196
    %252 = vmatprep.subr.mxu0 0.0
    %253 = vmatpush1.msra.mxu0 %v197
    %254 = vmatprep.subr.mxu0 0.0
    %255 = vmatpush1.msra.mxu0 %v198
    %256 = vmatprep.subr.mxu0 0.0
    %257 = vmatpush1.msra.mxu0 %v199
    %258 = vmatprep.subr.mxu0 0.0
    %259 = vmatpush1.msra.mxu0 %v200
    %260 = vmatprep.subr.mxu0 0.0
    %261 = vmatpush1.msra.mxu0 %v201
    %262 = vmatprep.subr.mxu0 0.0
    %263 = vmatpush1.msra.mxu0 %v202
    %264 = vmatprep.subr.mxu0 0.0
    %265 = vmatpush1.msra.mxu0 %v203
    %266 = vmatprep.subr.mxu0 0.0
    %267 = vmatpush1.msra.mxu0 %v204
    %268 = vmatprep.subr.mxu0 0.0
    %269 = vmatpush1.msra.mxu0 %v205
    %270 = vmatprep.subr.mxu0 0.0
    %271 = vmatpush1.msra.mxu0 %v206
    %272 = vmatprep.subr.mxu0 0.0
    %273 = vmatpush1.msra.mxu0 %v207
    %274 = vmatprep.subr.mxu0 0.0
    %275 = vmatpush1.msra.mxu0 %v208
    %276 = vmatprep.subr.mxu0 0.0
    %277 = vmatpush1.msra.mxu0 %v209
    %278 = vmatprep.subr.mxu0 0.0
    %279 = vmatpush1.msra.mxu0 %v210
    %280 = vmatprep.subr.mxu0 0.0
    %281 = vmatpush1.msra.mxu0 %v211
    %282 = vmatprep.subr.mxu0 0.0
    %283 = vmatpush1.msra.mxu0 %v212
    %284 = vmatprep.mubr.f32.mxu0 %v180
    %285 = vmatmul.mubr.f32.gmra.mrb[0].mxu0 %v179
    %v286 = vpop.f32.mrb[0].mxu0
    %v287 = vadd.f32 %v218, %v286
    %v288 = vpop.f32.mrb[0].mxu0
    %289 = vdwg.mxu0
    %v290 = vmax.f32 %v287, 0.0
    %v291 = vmin.f32 %v287, 0.0
    %v292 = vstv %s44
    %v293 = vmul.f32 %v292, %v291
    %v294 = vadd.f32 %v290, %v293
    %v295 = vld [vmem:[%s8] sm:$0xff]
    %v296 = vld [vmem:[%s8 + $0x8] sm:$0xff]
    %v297 = vld [vmem:[%s8 + $0x10] sm:$0xff]
    %v298 = vld [vmem:[%s8 + $0x18] sm:$0xff]
    %v299 = vld [vmem:[%s8 + $0x20] sm:$0xff]
    %v300 = vld [vmem:[%s8 + $0x28] sm:$0xff]
    %v301 = vld [vmem:[%s8 + $0x30] sm:$0xff]
    %v302 = vld [vmem:[%s8 + $0x38] sm:$0xff]
    %v303 = vld [vmem:[%s9] sm:$0x1]
    %v305 = vlaneseq
    %v306 = vshrl.u32 %v305, 7
    %v307 = vsub.s32 0, %v306
    %v308 = vrot.slane %v303, %v307
    %vm310 = vcmask 523264
    %v312 = vsel %vm310, %v294, 0
    %314 = vmatprep.subr.mxu0 0.0
    %315 = vmatpush1.msra.mxu0 %v295
    %316 = vmatprep.subr.mxu0 0.0
    %317 = vmatpush1.msra.mxu0 %v296
    %318 = vmatprep.subr.mxu0 0.0
    %319 = vmatpush1.msra.mxu0 %v297
    %320 = vmatprep.subr.mxu0 0.0
    %321 = vmatpush1.msra.mxu0 %v298
    %322 = vmatprep.subr.mxu0 0.0
    %323 = vmatpush1.msra.mxu0 %v299
    %324 = vmatprep.subr.mxu0 0.0
    %325 = vmatpush1.msra.mxu0 %v300
    %326 = vmatprep.subr.mxu0 0.0
    %327 = vmatpush1.msra.mxu0 %v301
    %328 = vmatprep.subr.mxu0 0.0
    %329 = vmatpush1.msra.mxu0 %v302
    %330 = vmatprep.subr.mxu0 0.0
    %331 = vmatpush1.msra.mxu0 0.0
    %332 = vmatprep.subr.mxu0 0.0
    %333 = vmatpush1.msra.mxu0 0.0
    %334 = vmatprep.subr.mxu0 0.0
    %335 = vmatpush1.msra.mxu0 0.0
    %336 = vmatprep.subr.mxu0 0.0
    %337 = vmatpush1.msra.mxu0 0.0
    %338 = vmatprep.subr.mxu0 0.0
    %339 = vmatpush1.msra.mxu0 0.0
    %340 = vmatprep.subr.mxu0 0.0
    %341 = vmatpush1.msra.mxu0 0.0
    %342 = vmatprep.subr.mxu0 0.0
    %343 = vmatpush1.msra.mxu0 0.0
    %344 = vmatprep.subr.mxu0 0.0
    %345 = vmatpush1.msra.mxu0 0.0
    %346 = vmatprep.subr.mxu0 0.0
    %347 = vmatpush1.msra.mxu0 0.0
    %348 = vmatprep.subr.mxu0 0.0
    %349 = vmatpush1.msra.mxu0 0.0
    %350 = vmatprep.subr.mxu0 0.0
    %351 = vmatpush1.msra.mxu0 0.0
    %352 = vmatprep.subr.mxu0 0.0
    %353 = vmatpush1.msra.mxu0 0.0
    %354 = vmatprep.subr.mxu0 0.0
    %355 = vmatpush1.msra.mxu0 0.0
    %356 = vmatprep.subr.mxu0 0.0
    %357 = vmatpush1.msra.mxu0 0.0
    %358 = vmatprep.subr.mxu0 0.0
    %359 = vmatpush1.msra.mxu0 0.0
    %360 = vmatprep.subr.mxu0 0.0
    %361 = vmatpush1.msra.mxu0 0.0
    %362 = vmatprep.subr.mxu0 0.0
    %363 = vmatpush1.msra.mxu0 0.0
    %364 = vmatprep.subr.mxu0 0.0
    %365 = vmatpush1.msra.mxu0 0.0
    %366 = vmatprep.subr.mxu0 0.0
    %367 = vmatpush1.msra.mxu0 0.0
    %368 = vmatprep.subr.mxu0 0.0
    %369 = vmatpush1.msra.mxu0 0.0
    %370 = vmatprep.subr.mxu0 0.0
    %371 = vmatpush1.msra.mxu0 0.0
    %372 = vmatprep.subr.mxu0 0.0
    %373 = vmatpush1.msra.mxu0 0.0
    %374 = vmatprep.subr.mxu0 0.0
    %375 = vmatpush1.msra.mxu0 0.0
    %376 = vmatprep.subr.mxu0 0.0
    %377 = vmatpush1.msra.mxu0 0.0
    %378 = vmatprep.mubr.f32.mxu0 0.0
    %379 = vmatmul.mubr.f32.gmra.mrb[0].mxu0 %v312
    %v380 = vpop.f32.mrb[0].mxu0
    %v381 = vadd.f32 %v308, %v380
    %v382 = vpop.f32.mrb[0].mxu0
    %383 = vdwg.mxu0
    %v384 = vmax.f32 %v381, 0.0
    %v385 = vmin.f32 %v381, 0.0
    %v386 = vstv %s45
    %v387 = vmul.f32 %v386, %v385
    %v388 = vadd.f32 %v384, %v387
    %389 = vst [vmem:[#allocation4] sm:$0xff] %v388
    // Predicated region
    $region38: #{tpu_custom_call.1} parent=1 // pred_check
      _
    $region39: #{tpu_custom_call.1} parent=1 // pred_check_branch
      %391 = sbr.rel (0) target = $region41
    $region40: #{tpu_custom_call.1} parent=1 // pred_region
      %s393 = ssub.s32 128, 128
      %394 = vsyncadd [#allocation5], %s393
      %s396 = sshll.u32 [#allocation4], 4
      %s397 = int_to_ptr.vmem [resolvable:$true] %s396
      %399 = dma.vmem_to_hbm [thread:$0]  %s397, 128, %s10, [#allocation5]
    $region41: #{tpu_custom_call.1} parent=1 // pred_fallthru
      _
    // Predicated region
    $region42: #{tpu_custom_call.1} parent=1 // pred_check
      _
    $region43: #{tpu_custom_call.1} parent=1 // pred_check_branch
      %401 = sbr.rel (0) target = $region45
    $region44: #{tpu_custom_call.1} parent=1 // pred_region
      %s403 = ssub.s32 256, 256
      %404 = vsyncadd [#allocation7], %s403
      %s406 = sshll.u32 [#allocation6], 4
      %s407 = int_to_ptr.vmem [resolvable:$true] %s406
      %409 = dma.vmem_to_hbm [thread:$0]  %s407, 256, %s11, [#allocation7]
    $region45: #{tpu_custom_call.1} parent=1 // pred_fallthru
      _
    // Predicated region
    $region46: #{tpu_custom_call.1} parent=1 // pred_check
      _
    $region47: #{tpu_custom_call.1} parent=1 // pred_check_branch
      %411 = sbr.rel (0) target = $region49
    $region48: #{tpu_custom_call.1} parent=1 // pred_region
      %412 = dma.done [#allocation5], 128
    $region49: #{tpu_custom_call.1} parent=1 // pred_fallthru
      _
    // Predicated region
    $region50: #{tpu_custom_call.1} parent=1 // pred_check
      _
    $region51: #{tpu_custom_call.1} parent=1 // pred_check_branch
      %414 = sbr.rel (0) target = $region53
    $region52: #{tpu_custom_call.1} parent=1 // pred_region
      %415 = dma.done [#allocation7], 256
    $region53: #{tpu_custom_call.1} parent=1 // pred_fallthru
      _
    %416 = vsyncpa [#allocation5], 1
    %417 = vsyncpa [#allocation7], 1

</llo_original>
